<compile_context>
chip_gen: v6e
topology: v6e:2x2x1
jax: 0.10.0
libtpu: 0.0.40
codegen_flags: <defaults>
</compile_context>

<pallas_src>
import jax
import jax.numpy as jnp
from jax.experimental import pallas as pl
from jax.experimental.pallas import tpu as pltpu


# ----------------------------------------------------------------------------
# Pallas kernel: fused 3-layer MLP energy, transposed (batch on lane axis)
#   h1_t = relu(W1^T @ z_t + b1);  h2_t = relu(W2^T @ h1_t + b2)
#   e_row = sum_sublanes(h2_t * w3_col) + b3                      -> (1, tb)
# ----------------------------------------------------------------------------
def _mlp_energy_kernel(zt_ref, w1t_ref, b1_ref, w2t_ref, b2_ref, w3_ref,
                       b3_ref, o_ref):
    # In-kernel f32 -> bf16 cast of the z tile (VPU convert, hidden under DMA).
    z_t = zt_ref[...].astype(w1t_ref.dtype)                        # (D_in, tb)
    # Layer 1: (Hp, D_in) @ (D_in, tb) -> (Hp, tb), f32 accumulation.
    h1 = jnp.dot(w1t_ref[...], z_t, preferred_element_type=jnp.float32)
    h1 = jnp.maximum(h1 + b1_ref[...], 0.0)                        # bias bcast over lanes
    # Layer 2: (Hp, Hp) @ (Hp, tb) -> (Hp, tb).
    h2 = jnp.dot(w2t_ref[...], h1.astype(w2t_ref.dtype),
                 preferred_element_type=jnp.float32)
    h2 = jnp.maximum(h2 + b2_ref[...], 0.0)
    # Layer 3 (dim_out == 1): VPU multiply + sublane reduce -> lane-dense row.
    score = jnp.sum(h2 * w3_ref[...], axis=0, keepdims=True)       # (1, tb) f32
    o_ref[...] = (score + b3_ref[0]).astype(o_ref.dtype)           # b3: SMEM scalar


# ----------------------------------------------------------------------------
# Wrapper
# ----------------------------------------------------------------------------
def _num_tensorcores():
    """v7x has 2 TensorCores per chip; v5e/v6e have 1."""
    try:
        kind = (jax.devices()[0].device_kind or "").lower()
    except Exception:
        return 1
    return 2 if "v7" in kind else 1


def data_distance_estimator_xu_forward(z, params, *, tb=None,
                                       matmul_dtype=jnp.bfloat16):
    """Pallas forward for DataDistanceEstimatorXu, i.e. net(z_batch).

    z      : (B, dim_x + dim_u) float32
    params : dict with w1 (Din,H), b1 (1,H), w2 (H,H), b2 (1,H), w3 (H,1), b3 (1,1)
    returns: (B, 1) float32 energy
    """
    B, D_in = z.shape
    H = params["w1"].shape[1]
    assert params["w3"].shape == (H, 1), "net.dim_out must be 1"

    md = jnp.dtype(matmul_dtype)

    # --- hidden dim zero-padded to 128 lanes; weights pre-transposed so the
    #     batch rides the lane axis inside the kernel -----------------------
    Hp = 128 * pl.cdiv(H, 128)
    w1t = jnp.zeros((Hp, D_in), md).at[:H, :].set(params["w1"].T.astype(md))
    b1 = jnp.zeros((Hp, 1), jnp.float32).at[:H, 0].set(
        params["b1"].astype(jnp.float32).reshape(H))
    w2t = jnp.zeros((Hp, Hp), md).at[:H, :H].set(params["w2"].T.astype(md))
    b2 = jnp.zeros((Hp, 1), jnp.float32).at[:H, 0].set(
        params["b2"].astype(jnp.float32).reshape(H))
    w3c = jnp.zeros((Hp, 1), jnp.float32).at[:H, :].set(
        params["w3"].astype(jnp.float32))
    b3 = params["b3"].astype(jnp.float32).reshape((1,))            # SMEM scalar

    # --- batch tile: multiple of 128; fewest steps on single-TC chips, two
    #     balanced steps on v7x; capped at 4096 rows -------------------------
    if tb is None:
        ntiles = pl.cdiv(B, 128)
        if _num_tensorcores() >= 2 and ntiles > 1:
            tb = 128 * pl.cdiv(ntiles, 2)       # ~half the tiles per TensorCore
        else:
            tb = 128 * ntiles                   # single grid step if possible
        tb = max(128, min(tb, 4096))
    assert tb % 128 == 0

    pad_B = tb * pl.cdiv(B, tb)
    zt = z.astype(jnp.float32).T                                    # (D_in, B)
    if pad_B != B:
        zt = jnp.zeros((D_in, pad_B), jnp.float32).at[:, :B].set(zt)
    grid = (pad_B // tb,)

    # --- VMEM budget from lane-padded tile sizes + intermediates + weights ---
    lane = lambda n: 128 * pl.cdiv(n, 128)
    sub = lambda n: 8 * pl.cdiv(n, 8)
    tbl = lane(tb)
    io_bytes = 2 * (sub(D_in) * tbl * 4 + sub(1) * tbl * 4)   # dbl-buffered z/out tiles
    inter_bytes = (2 * Hp * tbl * 4                           # h1/h2 in f32
                   + Hp * tbl * 2 + sub(D_in) * tbl * 2)      # bf16 casts
    weight_bytes = 2 * (sub(Hp) * lane(D_in) * 2              # w1t (dbl-buffered)
                        + Hp * Hp * 2                         # w2t
                        + 3 * sub(Hp) * 128 * 4)              # b1/b2/w3 lane-padded
    vmem_limit = int(min(max(io_bytes + inter_bytes + weight_bytes + (4 << 20),
                             8 << 20),
                         48 << 20))

    full = lambda a: pl.BlockSpec(a.shape, lambda i: (0, 0))  # resident weights

    out_row = pl.pallas_call(
        _mlp_energy_kernel,
        out_shape=jax.ShapeDtypeStruct((1, pad_B), jnp.float32),
        grid_spec=pltpu.PrefetchScalarGridSpec(
            num_scalar_prefetch=0,
            grid=grid,
            in_specs=[
                pl.BlockSpec((D_in, tb), lambda i: (0, i)),   # streamed z^T tile
                full(w1t), full(b1), full(w2t), full(b2), full(w3c),
                pl.BlockSpec(memory_space=pltpu.MemorySpace.SMEM),  # b3 scalar
            ],
            out_specs=pl.BlockSpec((1, tb), lambda i: (0, i)),      # lane-dense out
        ),
        compiler_params=pltpu.CompilerParams(
            dimension_semantics=("parallel",),
            vmem_limit_bytes=vmem_limit),
    )(zt, w1t, b1, w2t, b2, w3c, b3)

    return out_row[0, :B].reshape(B, 1)


# ----------------------------------------------------------------------------
# Deterministic synthetic parameters + reference
# ----------------------------------------------------------------------------
def make_params(key, dim_in, hidden):
    ks = jax.random.split(key, 6)
    scale1 = 1.0 / jnp.sqrt(dim_in)
    scale2 = 1.0 / jnp.sqrt(hidden)
    return {
        "w1": jax.random.normal(ks[0], (dim_in, hidden), jnp.float32) * scale1,
        "b1": jax.random.normal(ks[1], (1, hidden), jnp.float32) * 0.1,
        "w2": jax.random.normal(ks[2], (hidden, hidden), jnp.float32) * scale2,
        "b2": jax.random.normal(ks[3], (1, hidden), jnp.float32) * 0.1,
        "w3": jax.random.normal(ks[4], (hidden, 1), jnp.float32) * scale2,
        "b3": jax.random.normal(ks[5], (1, 1), jnp.float32) * 0.1,
    }


def reference_forward(z, p, matmul_dtype=jnp.float32):
    # Quantize matmul inputs through matmul_dtype to mirror the kernel's
    # bf16-in / f32-accumulate path, keeping the check tight.
    q = lambda a: a.astype(matmul_dtype).astype(jnp.float32)
    h1 = jnp.maximum(jnp.dot(q(z), q(p["w1"])) + p["b1"], 0.0)
    h2 = jnp.maximum(jnp.dot(q(h1), q(p["w2"])) + p["b2"], 0.0)
    return h2 @ p["w3"] + p["b3"]


if __name__ == "__main__":
    dim_x, dim_u, hidden = 4, 4, 32
    dim_in = dim_x + dim_u
    B = 256

    key = jax.random.PRNGKey(0)
    k_param, k_z = jax.random.split(key)
    params = make_params(k_param, dim_in, hidden)

    # z_batch sampled from a fixed domain [lb, ub] (same role as
    # sample_from_domain, deterministic via PRNGKey(0)).
    domain_lb = -jnp.ones((dim_in,), jnp.float32)
    domain_ub = jnp.ones((dim_in,), jnp.float32)
    z = domain_lb + (domain_ub - domain_lb) * jax.random.uniform(
        k_z, (B, dim_in), jnp.float32)

    out = data_distance_estimator_xu_forward(z, params)
    out = jax.block_until_ready(out)

    ref = reference_forward(z, params, matmul_dtype=jnp.bfloat16)
    assert out.shape == (B, 1)
    assert jnp.allclose(out, ref, atol=1e-2, rtol=1e-2), float(
        jnp.max(jnp.abs(out - ref)))

    # TODO(synk): training utilities (DataDistance softmin targets, gradients)
    # are not part of forward() and are left to plain JAX.
    print("KERNEL_OK")
</pallas_src>

<mosaic_0001>
module attributes {stable_mosaic.version = 11 : i64} {
  func.func @_mlp_energy_kernel(%arg0: i32, %arg1: memref<8x256xf32, #tpu.memory_space<vmem>>, %arg2: memref<128x8xbf16, #tpu.memory_space<vmem>>, %arg3: memref<128x1xf32, #tpu.memory_space<vmem>>, %arg4: memref<128x128xbf16, #tpu.memory_space<vmem>>, %arg5: memref<128x1xf32, #tpu.memory_space<vmem>>, %arg6: memref<128x1xf32, #tpu.memory_space<vmem>>, %arg7: memref<1xf32, #tpu.memory_space<smem>>, %arg8: memref<1x256xf32, #tpu.memory_space<vmem>>) attributes {dimension_semantics = [#tpu.dimension_semantics<parallel>], iteration_bounds = array<i64: 1>, scalar_prefetch = 0 : i64, scratch_operands = 0 : i64, tpu.core_type = #tpu.core_type<tc>, window_params = [{transform_indices = @transform_0, window_bounds = array<i64: 8, 256>}, {pipeline_mode = #tpu.pipeline_mode<synchronous>, transform_indices = @transform_1, window_bounds = array<i64: 128, 8>}, {pipeline_mode = #tpu.pipeline_mode<synchronous>, transform_indices = @transform_2, window_bounds = array<i64: 128, 1>}, {pipeline_mode = #tpu.pipeline_mode<synchronous>, transform_indices = @transform_3, window_bounds = array<i64: 128, 128>}, {pipeline_mode = #tpu.pipeline_mode<synchronous>, transform_indices = @transform_4, window_bounds = array<i64: 128, 1>}, {pipeline_mode = #tpu.pipeline_mode<synchronous>, transform_indices = @transform_5, window_bounds = array<i64: 128, 1>}, {transform_indices = @transform_6, window_bounds = array<i64: 1>}, {transform_indices = @transform_7, window_bounds = array<i64: 1, 256>}]} {
    %c0 = arith.constant 0 : index
    %c0_0 = arith.constant 0 : index
    %0 = vector.load %arg1[%c0, %c0_0] : memref<8x256xf32, #tpu.memory_space<vmem>>, vector<8x256xf32>
    %1 = arith.truncf %0 : vector<8x256xf32> to vector<8x256xbf16>
    %c0_1 = arith.constant 0 : index
    %c0_2 = arith.constant 0 : index
    %2 = vector.load %arg2[%c0_1, %c0_2] : memref<128x8xbf16, #tpu.memory_space<vmem>>, vector<128x8xbf16>
    %cst = arith.constant dense<0.000000e+00> : vector<128x256xf32>
    %3 = tpu.matmul %2, %1, %cst {dimension_numbers = #tpu.dot_dimension_numbers<[1], [0], [0], [1], [0, 0, 1, 1], [], []>} : vector<128x8xbf16>, vector<8x256xbf16>, vector<128x256xf32> -> vector<128x256xf32>
    %c0_3 = arith.constant 0 : index
    %c0_4 = arith.constant 0 : index
    %4 = vector.load %arg3[%c0_3, %c0_4] : memref<128x1xf32, #tpu.memory_space<vmem>>, vector<128x1xf32>
    %5 = vector.broadcast %4 : vector<128x1xf32> to vector<128x256xf32>
    %6 = arith.addf %3, %5 : vector<128x256xf32>
    %cst_5 = arith.constant 0.000000e+00 : f32
    %7 = vector.broadcast %cst_5 : f32 to vector<128x256xf32>
    %8 = arith.maximumf %6, %7 : vector<128x256xf32>
    %c0_6 = arith.constant 0 : index
    %c0_7 = arith.constant 0 : index
    %9 = vector.load %arg4[%c0_6, %c0_7] : memref<128x128xbf16, #tpu.memory_space<vmem>>, vector<128x128xbf16>
    %10 = arith.truncf %8 : vector<128x256xf32> to vector<128x256xbf16>
    %cst_8 = arith.constant dense<0.000000e+00> : vector<128x256xf32>
    %11 = tpu.matmul %9, %10, %cst_8 {dimension_numbers = #tpu.dot_dimension_numbers<[1], [0], [0], [1], [0, 0, 1, 1], [], []>} : vector<128x128xbf16>, vector<128x256xbf16>, vector<128x256xf32> -> vector<128x256xf32>
    %c0_9 = arith.constant 0 : index
    %c0_10 = arith.constant 0 : index
    %12 = vector.load %arg5[%c0_9, %c0_10] : memref<128x1xf32, #tpu.memory_space<vmem>>, vector<128x1xf32>
    %13 = vector.broadcast %12 : vector<128x1xf32> to vector<128x256xf32>
    %14 = arith.addf %11, %13 : vector<128x256xf32>
    %cst_11 = arith.constant 0.000000e+00 : f32
    %15 = vector.broadcast %cst_11 : f32 to vector<128x256xf32>
    %16 = arith.maximumf %14, %15 : vector<128x256xf32>
    %c0_12 = arith.constant 0 : index
    %c0_13 = arith.constant 0 : index
    %17 = vector.load %arg6[%c0_12, %c0_13] : memref<128x1xf32, #tpu.memory_space<vmem>>, vector<128x1xf32>
    %18 = vector.broadcast %17 : vector<128x1xf32> to vector<128x256xf32>
    %19 = arith.mulf %16, %18 : vector<128x256xf32>
    %cst_14 = arith.constant dense<0.000000e+00> : vector<256xf32>
    %20 = vector.multi_reduction <add>, %19, %cst_14 [0] : vector<128x256xf32> to vector<256xf32>
    %21 = vector.shape_cast %20 : vector<256xf32> to vector<1x256xf32>
    %c0_15 = arith.constant 0 : index
    %22 = memref.load %arg7[%c0_15] : memref<1xf32, #tpu.memory_space<smem>>
    %23 = vector.broadcast %22 : f32 to vector<1x256xf32>
    %24 = arith.addf %21, %23 : vector<1x256xf32>
    %c0_16 = arith.constant 0 : index
    %c0_17 = arith.constant 0 : index
    %25 = vector.load %arg8[%c0_16, %c0_17] : memref<1x256xf32, #tpu.memory_space<vmem>>, vector<1x256xf32>
    tpu.vector_store %arg8[%c0_16, %c0_17], %24 {strides = array<i32>} : memref<1x256xf32, #tpu.memory_space<vmem>>, vector<1x256xf32>,
    return
  }
  func.func @transform_0(%arg0: i32) -> (i32, i32) {
    %c0_i32 = arith.constant 0 : i32
    %c0_i32_0 = arith.constant 0 : i32
    return %c0_i32, %arg0 : i32, i32
  }
  func.func @transform_1(%arg0: i32) -> (i32, i32) {
    %c0_i32 = arith.constant 0 : i32
    %c0_i32_0 = arith.constant 0 : i32
    %c0_i32_1 = arith.constant 0 : i32
    return %c0_i32, %c0_i32_0 : i32, i32
  }
  func.func @transform_2(%arg0: i32) -> (i32, i32) {
    %c0_i32 = arith.constant 0 : i32
    %c0_i32_0 = arith.constant 0 : i32
    %c0_i32_1 = arith.constant 0 : i32
    return %c0_i32, %c0_i32_0 : i32, i32
  }
  func.func @transform_3(%arg0: i32) -> (i32, i32) {
    %c0_i32 = arith.constant 0 : i32
    %c0_i32_0 = arith.constant 0 : i32
    %c0_i32_1 = arith.constant 0 : i32
    return %c0_i32, %c0_i32_0 : i32, i32
  }
  func.func @transform_4(%arg0: i32) -> (i32, i32) {
    %c0_i32 = arith.constant 0 : i32
    %c0_i32_0 = arith.constant 0 : i32
    %c0_i32_1 = arith.constant 0 : i32
    return %c0_i32, %c0_i32_0 : i32, i32
  }
  func.func @transform_5(%arg0: i32) -> (i32, i32) {
    %c0_i32 = arith.constant 0 : i32
    %c0_i32_0 = arith.constant 0 : i32
    %c0_i32_1 = arith.constant 0 : i32
    return %c0_i32, %c0_i32_0 : i32, i32
  }
  func.func @transform_6(%arg0: i32) -> i32 {
    %c0_i32 = arith.constant 0 : i32
    %c0_i32_0 = arith.constant 0 : i32
    return %c0_i32 : i32
  }
  func.func @transform_7(%arg0: i32) -> (i32, i32) {
    %c0_i32 = arith.constant 0 : i32
    %c0_i32_0 = arith.constant 0 : i32
    return %c0_i32, %arg0 : i32, i32
  }
}

</mosaic_0001>

<llo_original>
// kernel: tpu_custom_call.1
$region0: #{tpu_custom_call.1}
  #allocation0 [shape = 'u32[]', space=smem, size = 0x4, offset = 0x4, fixed_abs, tag = 'smem constant byte address 0x4 - core index']
  #allocation1 [shape = 'u32[144,128]{1,0:T(1,128)}', space=vmem, size = 0x12000, scoped, tag = 'internal scratch']
  #allocation2 [shape = 'f32[1]{0:T(128)S(6)}', space=smem, size = 0x200, scoped, tag = 'scoped memory for tpu_custom_call.1']
  %s0 = inlined_call_operand.vmem [shape: f32[8,256], index: 0, kind: input, shape index: {}]
  %s1 = inlined_call_operand.vmem [shape: bf16[128,8], index: 1, kind: input, shape index: {}]
  %s2 = inlined_call_operand.vmem [shape: f32[128,1], index: 2, kind: input, shape index: {}]
  %s3 = inlined_call_operand.vmem [shape: bf16[128,128], index: 3, kind: input, shape index: {}]
  %s4 = inlined_call_operand.vmem [shape: f32[128,1], index: 4, kind: input, shape index: {}]
  %s5 = inlined_call_operand.vmem [shape: f32[128,1], index: 5, kind: input, shape index: {}]
  %s6 = inlined_call_operand.<no memory space> [shape: f32[1], index: 6, kind: input, shape index: {}]
  %s7 = inlined_call_operand.hbm [shape: f32[1,256], index: 7, kind: output, shape index: {}]
  %s8 = sld [smem:[#allocation0]]
  $region38: #{tpu_custom_call.1} parent=0
    _
  %s10 = ssub.s32 1, %s8
  %s11 = scalar_select 0, %s10, %s8
  %12 = sst [smem:[#allocation2]] %s6
  $region1: #{tpu_custom_call.1} parent=0
    #allocation3 [shape = 'u8[1024]{0}', space=vmem, size = 0x400, scoped, tag = 'output window, operand 0, single buffered']
    #allocation4 [shape = 's32[1]{0}', space=sflag, size = 0x4, scoped, tag = 'scoped memory for tpu_custom_call.1']
    %13 = vsyncpa [#allocation4], 0
    // Predicated region
    $region2: #{tpu_custom_call.1} parent=1 // pred_check
      _
    $region3: #{tpu_custom_call.1} parent=1 // pred_check_branch
      %15 = sbr.rel (0) target = $region5
    $region4: #{tpu_custom_call.1} parent=1 // pred_region
      _
    $region5: #{tpu_custom_call.1} parent=1 // pred_fallthru
      _
    // Predicated region
    $region6: #{tpu_custom_call.1} parent=1 // pred_check
      _
    $region7: #{tpu_custom_call.1} parent=1 // pred_check_branch
      %17 = sbr.rel (0) target = $region9
    $region8: #{tpu_custom_call.1} parent=1 // pred_region
      _
    $region9: #{tpu_custom_call.1} parent=1 // pred_fallthru
      _
    // Predicated region
    $region10: #{tpu_custom_call.1} parent=1 // pred_check
      _
    $region11: #{tpu_custom_call.1} parent=1 // pred_check_branch
      %19 = sbr.rel (0) target = $region13
    $region12: #{tpu_custom_call.1} parent=1 // pred_region
      _
    $region13: #{tpu_custom_call.1} parent=1 // pred_fallthru
      _
    // Predicated region
    $region14: #{tpu_custom_call.1} parent=1 // pred_check
      _
    $region15: #{tpu_custom_call.1} parent=1 // pred_check_branch
      %21 = sbr.rel (0) target = $region17
    $region16: #{tpu_custom_call.1} parent=1 // pred_region
      _
    $region17: #{tpu_custom_call.1} parent=1 // pred_fallthru
      _
    // Predicated region
    $region18: #{tpu_custom_call.1} parent=1 // pred_check
      _
    $region19: #{tpu_custom_call.1} parent=1 // pred_check_branch
      %23 = sbr.rel (0) target = $region21
    $region20: #{tpu_custom_call.1} parent=1 // pred_region
      _
    $region21: #{tpu_custom_call.1} parent=1 // pred_fallthru
      _
    // Predicated region
    $region22: #{tpu_custom_call.1} parent=1 // pred_check
      _
    $region23: #{tpu_custom_call.1} parent=1 // pred_check_branch
      %25 = sbr.rel (0) target = $region25
    $region24: #{tpu_custom_call.1} parent=1 // pred_region
      _
    $region25: #{tpu_custom_call.1} parent=1 // pred_fallthru
      _
    // Predicated region
    $region26: #{tpu_custom_call.1} parent=1 // pred_check
      _
    $region27: #{tpu_custom_call.1} parent=1 // pred_check_branch
      %27 = sbr.rel (0) target = $region29
    $region28: #{tpu_custom_call.1} parent=1 // pred_region
      _
    $region29: #{tpu_custom_call.1} parent=1 // pred_fallthru
      _
    %v29 = vld [vmem:[%s0] sm:$0xff]
    %v30 = vld [vmem:[%s0 + $0x8] sm:$0xff]
    %v31 = vpack.c.bf16 %v29, %v29
    %v32 = vpack.c.bf16 %v30, %v30
    %v33 = vld [vmem:[%s1] sm:$0xf]
    %v34 = vld [vmem:[%s1 + $0x4] sm:$0xf]
    %v35 = vld [vmem:[%s1 + $0x8] sm:$0xf]
    %v36 = vld [vmem:[%s1 + $0xc] sm:$0xf]
    %v37 = vld [vmem:[%s1 + $0x10] sm:$0xf]
    %v38 = vld [vmem:[%s1 + $0x14] sm:$0xf]
    %v39 = vld [vmem:[%s1 + $0x18] sm:$0xf]
    %v40 = vld [vmem:[%s1 + $0x1c] sm:$0xf]
    %v41 = vld [vmem:[%s1 + $0x20] sm:$0xf]
    %v42 = vld [vmem:[%s1 + $0x24] sm:$0xf]
    %v43 = vld [vmem:[%s1 + $0x28] sm:$0xf]
    %v44 = vld [vmem:[%s1 + $0x2c] sm:$0xf]
    %v45 = vld [vmem:[%s1 + $0x30] sm:$0xf]
    %v46 = vld [vmem:[%s1 + $0x34] sm:$0xf]
    %v47 = vld [vmem:[%s1 + $0x38] sm:$0xf]
    %v48 = vld [vmem:[%s1 + $0x3c] sm:$0xf]
    %v49 = vld [vmem:[%s2] sm:$0xff]
    %v50 = vld [vmem:[%s2 + $0x8] sm:$0xff]
    %v51 = vld [vmem:[%s2 + $0x10] sm:$0xff]
    %v52 = vld [vmem:[%s2 + $0x18] sm:$0xff]
    %v53 = vld [vmem:[%s2 + $0x20] sm:$0xff]
    %v54 = vld [vmem:[%s2 + $0x28] sm:$0xff]
    %v55 = vld [vmem:[%s2 + $0x30] sm:$0xff]
    %v56 = vld [vmem:[%s2 + $0x38] sm:$0xff]
    %v57 = vld [vmem:[%s2 + $0x40] sm:$0xff]
    %v58 = vld [vmem:[%s2 + $0x48] sm:$0xff]
    %v59 = vld [vmem:[%s2 + $0x50] sm:$0xff]
    %v60 = vld [vmem:[%s2 + $0x58] sm:$0xff]
    %v61 = vld [vmem:[%s2 + $0x60] sm:$0xff]
    %v62 = vld [vmem:[%s2 + $0x68] sm:$0xff]
    %v63 = vld [vmem:[%s2 + $0x70] sm:$0xff]
    %v64 = vld [vmem:[%s2 + $0x78] sm:$0xff]
    %66 = vset.pattern.permute.xlu0 0
    %67 = vperm.xlu0 %66, %v49
    %v68 = vpop.permute.xlu0 %67
    %71 = vset.pattern.permute.xlu0 0
    %72 = vperm.xlu0 %71, %v50
    %v73 = vpop.permute.xlu0 %72
    %76 = vset.pattern.permute.xlu0 0
    %77 = vperm.xlu0 %76, %v51
    %v78 = vpop.permute.xlu0 %77
    %81 = vset.pattern.permute.xlu0 0
    %82 = vperm.xlu0 %81, %v52
    %v83 = vpop.permute.xlu0 %82
    %86 = vset.pattern.permute.xlu0 0
    %87 = vperm.xlu0 %86, %v53
    %v88 = vpop.permute.xlu0 %87
    %91 = vset.pattern.permute.xlu0 0
    %92 = vperm.xlu0 %91, %v54
    %v93 = vpop.permute.xlu0 %92
    %96 = vset.pattern.permute.xlu0 0
    %97 = vperm.xlu0 %96, %v55
    %v98 = vpop.permute.xlu0 %97
    %101 = vset.pattern.permute.xlu0 0
    %102 = vperm.xlu0 %101, %v56
    %v103 = vpop.permute.xlu0 %102
    %106 = vset.pattern.permute.xlu0 0
    %107 = vperm.xlu0 %106, %v57
    %v108 = vpop.permute.xlu0 %107
    %111 = vset.pattern.permute.xlu0 0
    %112 = vperm.xlu0 %111, %v58
    %v113 = vpop.permute.xlu0 %112
    %116 = vset.pattern.permute.xlu0 0
    %117 = vperm.xlu0 %116, %v59
    %v118 = vpop.permute.xlu0 %117
    %121 = vset.pattern.permute.xlu0 0
    %122 = vperm.xlu0 %121, %v60
    %v123 = vpop.permute.xlu0 %122
    %126 = vset.pattern.permute.xlu0 0
    %127 = vperm.xlu0 %126, %v61
    %v128 = vpop.permute.xlu0 %127
    %131 = vset.pattern.permute.xlu0 0
    %132 = vperm.xlu0 %131, %v62
    %v133 = vpop.permute.xlu0 %132
    %136 = vset.pattern.permute.xlu0 0
    %137 = vperm.xlu0 %136, %v63
    %v138 = vpop.permute.xlu0 %137
    %141 = vset.pattern.permute.xlu0 0
    %142 = vperm.xlu0 %141, %v64
    %v143 = vpop.permute.xlu0 %142
    %v161 = vunpack.c.l.b16 %v33
    %v162 = vunpack.c.l.b16 %v34
    %v163 = vunpack.c.l.b16 %v35
    %v164 = vunpack.c.l.b16 %v36
    %v165 = vunpack.c.l.b16 %v37
    %v166 = vunpack.c.l.b16 %v38
    %v167 = vunpack.c.l.b16 %v39
    %v168 = vunpack.c.l.b16 %v40
    %v169 = vunpack.c.l.b16 %v41
    %v170 = vunpack.c.l.b16 %v42
    %v171 = vunpack.c.l.b16 %v43
    %v172 = vunpack.c.l.b16 %v44
    %v173 = vunpack.c.l.b16 %v45
    %v174 = vunpack.c.l.b16 %v46
    %v175 = vunpack.c.l.b16 %v47
    %v176 = vunpack.c.l.b16 %v48
    %v177 = vpack.c.b16 %v162, %v161
    %v178 = vpack.c.b16 %v164, %v163
    %v179 = vpack.c.b16 %v166, %v165
    %v180 = vpack.c.b16 %v168, %v167
    %v181 = vpack.c.b16 %v170, %v169
    %v182 = vpack.c.b16 %v172, %v171
    %v183 = vpack.c.b16 %v174, %v173
    %v184 = vpack.c.b16 %v176, %v175
    %vm185 = vcmask 64512
    %v187 = vsel %vm185, %v177, 0
    %v190 = vsel %vm185, %v178, 0
    %v193 = vsel %vm185, %v179, 0
    %v196 = vsel %vm185, %v180, 0
    %v199 = vsel %vm185, %v181, 0
    %v202 = vsel %vm185, %v182, 0
    %v205 = vsel %vm185, %v183, 0
    %v208 = vsel %vm185, %v184, 0
    %vm210 = vcmask 1043456
    %v212 = vsel %vm210, %v31, 0
    %v215 = vsel %vm210, %v32, 0
    %217 = vmatprep.subr.bf16.mxu0 0
    %218 = vmatpush1.bf16.msra.mxu0 0
    %219 = vmatprep.subr.bf16.mxu0 0
    %220 = vmatpush1.bf16.msra.mxu0 0
    %221 = vmatprep.subr.bf16.mxu0 0
    %222 = vmatpush1.bf16.msra.mxu0 0
    %223 = vmatprep.subr.bf16.mxu0 0
    %224 = vmatpush1.bf16.msra.mxu0 0
    %225 = vmatprep.subr.bf16.mxu0 0
    %226 = vmatpush1.bf16.msra.mxu0 0
    %227 = vmatprep.subr.bf16.mxu0 0
    %228 = vmatpush1.bf16.msra.mxu0 0
    %229 = vmatprep.subr.bf16.mxu0 0
    %230 = vmatpush1.bf16.msra.mxu0 0
    %231 = vmatprep.subr.bf16.mxu0 %v215
    %232 = vmatpush1.bf16.msra.mxu0 %v212
    %233 = vmatprep.subr.bf16.mxu0 0
    %234 = vmatpush2.bf16.msra.mxu0 0
    %235 = vmatprep.subr.bf16.mxu0 0
    %236 = vmatpush2.bf16.msra.mxu0 0
    %237 = vmatprep.subr.bf16.mxu0 0
    %238 = vmatpush2.bf16.msra.mxu0 0
    %239 = vmatprep.subr.bf16.mxu0 0
    %240 = vmatpush2.bf16.msra.mxu0 0
    %241 = vmatprep.subr.bf16.mxu0 0
    %242 = vmatpush2.bf16.msra.mxu0 0
    %243 = vmatprep.subr.bf16.mxu0 0
    %244 = vmatpush2.bf16.msra.mxu0 0
    %245 = vmatprep.subr.bf16.mxu0 0
    %246 = vmatpush2.bf16.msra.mxu0 0
    %247 = vmatprep.subr.bf16.mxu0 0
    %248 = vmatpush2.bf16.msra.mxu0 0
    %249 = vmatprep.mubr.bf16.mxu0 0
    %250 = vmatmul.mubr.bf16.gmra.mxu0 %v187
    %v251 = vpop.f32.mrf.mxu0
    %v252 = vadd.f32 %v68, %v251
    %v253 = vpop.f32.mrf.mxu0
    %v254 = vadd.f32 %v68, %v253
    %v255 = vpop.f32.mrf.mxu0
    %v256 = vadd.f32 %v73, %v255
    %v257 = vpop.f32.mrf.mxu0
    %v258 = vadd.f32 %v73, %v257
    %259 = vmatprep.mubr.bf16.mxu0 0
    %260 = vmatmul.mubr.bf16.gmra.mxu0 %v190
    %v261 = vpop.f32.mrf.mxu0
    %v262 = vadd.f32 %v78, %v261
    %v263 = vpop.f32.mrf.mxu0
    %v264 = vadd.f32 %v78, %v263
    %v265 = vpop.f32.mrf.mxu0
    %v266 = vadd.f32 %v83, %v265
    %v267 = vpop.f32.mrf.mxu0
    %v268 = vadd.f32 %v83, %v267
    %269 = vmatprep.mubr.bf16.mxu0 0
    %270 = vmatmul.mubr.bf16.gmra.mxu0 %v193
    %v271 = vpop.f32.mrf.mxu0
    %v272 = vadd.f32 %v88, %v271
    %v273 = vpop.f32.mrf.mxu0
    %v274 = vadd.f32 %v88, %v273
    %v275 = vpop.f32.mrf.mxu0
    %v276 = vadd.f32 %v93, %v275
    %v277 = vpop.f32.mrf.mxu0
    %v278 = vadd.f32 %v93, %v277
    %279 = vmatprep.mubr.bf16.mxu0 0
    %280 = vmatmul.mubr.bf16.gmra.mxu0 %v196
    %v281 = vpop.f32.mrf.mxu0
    %v282 = vadd.f32 %v98, %v281
    %v283 = vpop.f32.mrf.mxu0
    %v284 = vadd.f32 %v98, %v283
    %v285 = vpop.f32.mrf.mxu0
    %v286 = vadd.f32 %v103, %v285
    %v287 = vpop.f32.mrf.mxu0
    %v288 = vadd.f32 %v103, %v287
    %289 = vmatprep.mubr.bf16.mxu0 0
    %290 = vmatmul.mubr.bf16.gmra.mxu0 %v199
    %v291 = vpop.f32.mrf.mxu0
    %v292 = vadd.f32 %v108, %v291
    %v293 = vpop.f32.mrf.mxu0
    %v294 = vadd.f32 %v108, %v293
    %v295 = vpop.f32.mrf.mxu0
    %v296 = vadd.f32 %v113, %v295
    %v297 = vpop.f32.mrf.mxu0
    %v298 = vadd.f32 %v113, %v297
    %299 = vmatprep.mubr.bf16.mxu0 0
    %300 = vmatmul.mubr.bf16.gmra.mxu0 %v202
    %v301 = vpop.f32.mrf.mxu0
    %v302 = vadd.f32 %v118, %v301
    %v303 = vpop.f32.mrf.mxu0
    %v304 = vadd.f32 %v118, %v303
    %v305 = vpop.f32.mrf.mxu0
    %v306 = vadd.f32 %v123, %v305
    %v307 = vpop.f32.mrf.mxu0
    %v308 = vadd.f32 %v123, %v307
    %309 = vmatprep.mubr.bf16.mxu0 0
    %310 = vmatmul.mubr.bf16.gmra.mxu0 %v205
    %v311 = vpop.f32.mrf.mxu0
    %v312 = vadd.f32 %v128, %v311
    %v313 = vpop.f32.mrf.mxu0
    %v314 = vadd.f32 %v128, %v313
    %v315 = vpop.f32.mrf.mxu0
    %v316 = vadd.f32 %v133, %v315
    %v317 = vpop.f32.mrf.mxu0
    %v318 = vadd.f32 %v133, %v317
    %319 = vmatprep.mubr.bf16.mxu0 0
    %320 = vmatmul.mubr.bf16.gmra.mxu0 %v208
    %v321 = vpop.f32.mrf.mxu0
    %v322 = vadd.f32 %v138, %v321
    %v323 = vpop.f32.mrf.mxu0
    %v324 = vadd.f32 %v138, %v323
    %v325 = vpop.f32.mrf.mxu0
    %v326 = vadd.f32 %v143, %v325
    %v327 = vpop.f32.mrf.mxu0
    %v328 = vadd.f32 %v143, %v327
    %329 = vdwg.mxu0
    %v330 = vmax.f32 %v252, 0.0
    %v331 = vmax.f32 %v254, 0.0
    %v332 = vmax.f32 %v256, 0.0
    %v333 = vmax.f32 %v258, 0.0
    %v334 = vmax.f32 %v262, 0.0
    %v335 = vmax.f32 %v264, 0.0
    %v336 = vmax.f32 %v266, 0.0
    %v337 = vmax.f32 %v268, 0.0
    %v338 = vmax.f32 %v272, 0.0
    %v339 = vmax.f32 %v274, 0.0
    %v340 = vmax.f32 %v276, 0.0
    %v341 = vmax.f32 %v278, 0.0
    %v342 = vmax.f32 %v282, 0.0
    %v343 = vmax.f32 %v284, 0.0
    %v344 = vmax.f32 %v286, 0.0
    %v345 = vmax.f32 %v288, 0.0
    %v346 = vmax.f32 %v292, 0.0
    %v347 = vmax.f32 %v294, 0.0
    %v348 = vmax.f32 %v296, 0.0
    %v349 = vmax.f32 %v298, 0.0
    %v350 = vmax.f32 %v302, 0.0
    %v351 = vmax.f32 %v304, 0.0
    %v352 = vmax.f32 %v306, 0.0
    %v353 = vmax.f32 %v308, 0.0
    %v354 = vmax.f32 %v312, 0.0
    %v355 = vmax.f32 %v314, 0.0
    %v356 = vmax.f32 %v316, 0.0
    %v357 = vmax.f32 %v318, 0.0
    %v358 = vmax.f32 %v322, 0.0
    %v359 = vmax.f32 %v324, 0.0
    %v360 = vmax.f32 %v326, 0.0
    %v361 = vmax.f32 %v328, 0.0
    %v362 = vld [vmem:[%s3] sm:$0xf]
    %v363 = vld [vmem:[%s3 + $0x4] sm:$0xf]
    %v364 = vld [vmem:[%s3 + $0x8] sm:$0xf]
    %v365 = vld [vmem:[%s3 + $0xc] sm:$0xf]
    %v366 = vld [vmem:[%s3 + $0x10] sm:$0xf]
    %v367 = vld [vmem:[%s3 + $0x14] sm:$0xf]
    %v368 = vld [vmem:[%s3 + $0x18] sm:$0xf]
    %v369 = vld [vmem:[%s3 + $0x1c] sm:$0xf]
    %v370 = vld [vmem:[%s3 + $0x20] sm:$0xf]
    %v371 = vld [vmem:[%s3 + $0x24] sm:$0xf]
    %v372 = vld [vmem:[%s3 + $0x28] sm:$0xf]
    %v373 = vld [vmem:[%s3 + $0x2c] sm:$0xf]
    %v374 = vld [vmem:[%s3 + $0x30] sm:$0xf]
    %v375 = vld [vmem:[%s3 + $0x34] sm:$0xf]
    %v376 = vld [vmem:[%s3 + $0x38] sm:$0xf]
    %v377 = vld [vmem:[%s3 + $0x3c] sm:$0xf]
    %v378 = vpack.c.bf16 %v332, %v330
    %v379 = vpack.c.bf16 %v333, %v331
    %v380 = vpack.c.bf16 %v336, %v334
    %v381 = vpack.c.bf16 %v337, %v335
    %v382 = vpack.c.bf16 %v340, %v338
    %v383 = vpack.c.bf16 %v341, %v339
    %v384 = vpack.c.bf16 %v344, %v342
    %v385 = vpack.c.bf16 %v345, %v343
    %v386 = vpack.c.bf16 %v348, %v346
    %v387 = vpack.c.bf16 %v349, %v347
    %v388 = vpack.c.bf16 %v352, %v350
    %v389 = vpack.c.bf16 %v353, %v351
    %v390 = vpack.c.bf16 %v356, %v354
    %v391 = vpack.c.bf16 %v357, %v355
    %v392 = vpack.c.bf16 %v360, %v358
    %v393 = vpack.c.bf16 %v361, %v359
    %v394 = vld [vmem:[%s4] sm:$0xff]
    %v395 = vld [vmem:[%s4 + $0x8] sm:$0xff]
    %v396 = vld [vmem:[%s4 + $0x10] sm:$0xff]
    %v397 = vld [vmem:[%s4 + $0x18] sm:$0xff]
    %v398 = vld [vmem:[%s4 + $0x20] sm:$0xff]
    %v399 = vld [vmem:[%s4 + $0x28] sm:$0xff]
    %v400 = vld [vmem:[%s4 + $0x30] sm:$0xff]
    %v401 = vld [vmem:[%s4 + $0x38] sm:$0xff]
    %v402 = vld [vmem:[%s4 + $0x40] sm:$0xff]
    %v403 = vld [vmem:[%s4 + $0x48] sm:$0xff]
    %v404 = vld [vmem:[%s4 + $0x50] sm:$0xff]
    %v405 = vld [vmem:[%s4 + $0x58] sm:$0xff]
    %v406 = vld [vmem:[%s4 + $0x60] sm:$0xff]
    %v407 = vld [vmem:[%s4 + $0x68] sm:$0xff]
    %v408 = vld [vmem:[%s4 + $0x70] sm:$0xff]
    %v409 = vld [vmem:[%s4 + $0x78] sm:$0xff]
    %411 = vset.pattern.permute.xlu0 0
    %412 = vperm.xlu0 %411, %v394
    %v413 = vpop.permute.xlu0 %412
    %416 = vset.pattern.permute.xlu0 0
    %417 = vperm.xlu0 %416, %v395
    %v418 = vpop.permute.xlu0 %417
    %421 = vset.pattern.permute.xlu0 0
    %422 = vperm.xlu0 %421, %v396
    %v423 = vpop.permute.xlu0 %422
    %426 = vset.pattern.permute.xlu0 0
    %427 = vperm.xlu0 %426, %v397
    %v428 = vpop.permute.xlu0 %427
    %431 = vset.pattern.permute.xlu0 0
    %432 = vperm.xlu0 %431, %v398
    %v433 = vpop.permute.xlu0 %432
    %436 = vset.pattern.permute.xlu0 0
    %437 = vperm.xlu0 %436, %v399
    %v438 = vpop.permute.xlu0 %437
    %441 = vset.pattern.permute.xlu0 0
    %442 = vperm.xlu0 %441, %v400
    %v443 = vpop.permute.xlu0 %442
    %446 = vset.pattern.permute.xlu0 0
    %447 = vperm.xlu0 %446, %v401
    %v448 = vpop.permute.xlu0 %447
    %451 = vset.pattern.permute.xlu0 0
    %452 = vperm.xlu0 %451, %v402
    %v453 = vpop.permute.xlu0 %452
    %456 = vset.pattern.permute.xlu0 0
    %457 = vperm.xlu0 %456, %v403
    %v458 = vpop.permute.xlu0 %457
    %461 = vset.pattern.permute.xlu0 0
    %462 = vperm.xlu0 %461, %v404
    %v463 = vpop.permute.xlu0 %462
    %466 = vset.pattern.permute.xlu0 0
    %467 = vperm.xlu0 %466, %v405
    %v468 = vpop.permute.xlu0 %467
    %471 = vset.pattern.permute.xlu0 0
    %472 = vperm.xlu0 %471, %v406
    %v473 = vpop.permute.xlu0 %472
    %476 = vset.pattern.permute.xlu0 0
    %477 = vperm.xlu0 %476, %v407
    %v478 = vpop.permute.xlu0 %477
    %481 = vset.pattern.permute.xlu0 0
    %482 = vperm.xlu0 %481, %v408
    %v483 = vpop.permute.xlu0 %482
    %486 = vset.pattern.permute.xlu0 0
    %487 = vperm.xlu0 %486, %v409
    %v488 = vpop.permute.xlu0 %487
    %v506 = vunpack.c.l.b16 %v362
    %v507 = vunpack.c.l.b16 %v363
    %v508 = vunpack.c.l.b16 %v364
    %v509 = vunpack.c.l.b16 %v365
    %v510 = vunpack.c.l.b16 %v366
    %v511 = vunpack.c.l.b16 %v367
    %v512 = vunpack.c.l.b16 %v368
    %v513 = vunpack.c.l.b16 %v369
    %v514 = vunpack.c.l.b16 %v370
    %v515 = vunpack.c.l.b16 %v371
    %v516 = vunpack.c.l.b16 %v372
    %v517 = vunpack.c.l.b16 %v373
    %v518 = vunpack.c.l.b16 %v374
    %v519 = vunpack.c.l.b16 %v375
    %v520 = vunpack.c.l.b16 %v376
    %v521 = vunpack.c.l.b16 %v377
    %v522 = vpack.c.b16 %v507, %v506
    %v523 = vpack.c.b16 %v509, %v508
    %v524 = vpack.c.b16 %v511, %v510
    %v525 = vpack.c.b16 %v513, %v512
    %v526 = vpack.c.b16 %v515, %v514
    %v527 = vpack.c.b16 %v517, %v516
    %v528 = vpack.c.b16 %v519, %v518
    %v529 = vpack.c.b16 %v521, %v520
    %538 = vmatprep.subr.bf16.mxu0 %v393
    %539 = vmatpush1.bf16.msra.mxu0 %v392
    %540 = vmatprep.subr.bf16.mxu0 %v391
    %541 = vmatpush1.bf16.msra.mxu0 %v390
    %542 = vmatprep.subr.bf16.mxu0 %v389
    %543 = vmatpush1.bf16.msra.mxu0 %v388
    %544 = vmatprep.subr.bf16.mxu0 %v387
    %545 = vmatpush1.bf16.msra.mxu0 %v386
    %546 = vmatprep.subr.bf16.mxu0 %v385
    %547 = vmatpush1.bf16.msra.mxu0 %v384
    %548 = vmatprep.subr.bf16.mxu0 %v383
    %549 = vmatpush1.bf16.msra.mxu0 %v382
    %550 = vmatprep.subr.bf16.mxu0 %v381
    %551 = vmatpush1.bf16.msra.mxu0 %v380
    %552 = vmatprep.subr.bf16.mxu0 %v379
    %553 = vmatpush1.bf16.msra.mxu0 %v378
    %554 = vmatprep.subr.bf16.mxu0 0
    %555 = vmatpush2.bf16.msra.mxu0 0
    %556 = vmatprep.subr.bf16.mxu0 0
    %557 = vmatpush2.bf16.msra.mxu0 0
    %558 = vmatprep.subr.bf16.mxu0 0
    %559 = vmatpush2.bf16.msra.mxu0 0
    %560 = vmatprep.subr.bf16.mxu0 0
    %561 = vmatpush2.bf16.msra.mxu0 0
    %562 = vmatprep.subr.bf16.mxu0 0
    %563 = vmatpush2.bf16.msra.mxu0 0
    %564 = vmatprep.subr.bf16.mxu0 0
    %565 = vmatpush2.bf16.msra.mxu0 0
    %566 = vmatprep.subr.bf16.mxu0 0
    %567 = vmatpush2.bf16.msra.mxu0 0
    %568 = vmatprep.subr.bf16.mxu0 0
    %569 = vmatpush2.bf16.msra.mxu0 0
    %570 = vmatprep.mubr.bf16.mxu0 0
    %571 = vmatmul.mubr.bf16.gmra.mxu0 %v522
    %v572 = vpop.f32.mrf.mxu0
    %v573 = vadd.f32 %v413, %v572
    %v574 = vpop.f32.mrf.mxu0
    %v575 = vadd.f32 %v413, %v574
    %v576 = vpop.f32.mrf.mxu0
    %v577 = vadd.f32 %v418, %v576
    %v578 = vpop.f32.mrf.mxu0
    %v579 = vadd.f32 %v418, %v578
    %580 = vmatprep.mubr.bf16.mxu0 0
    %581 = vmatmul.mubr.bf16.gmra.mxu0 %v523
    %v582 = vpop.f32.mrf.mxu0
    %v583 = vadd.f32 %v423, %v582
    %v584 = vpop.f32.mrf.mxu0
    %v585 = vadd.f32 %v423, %v584
    %v586 = vpop.f32.mrf.mxu0
    %v587 = vadd.f32 %v428, %v586
    %v588 = vpop.f32.mrf.mxu0
    %v589 = vadd.f32 %v428, %v588
    %590 = vmatprep.mubr.bf16.mxu0 0
    %591 = vmatmul.mubr.bf16.gmra.mxu0 %v524
    %v592 = vpop.f32.mrf.mxu0
    %v593 = vadd.f32 %v433, %v592
    %v594 = vpop.f32.mrf.mxu0
    %v595 = vadd.f32 %v433, %v594
    %v596 = vpop.f32.mrf.mxu0
    %v597 = vadd.f32 %v438, %v596
    %v598 = vpop.f32.mrf.mxu0
    %v599 = vadd.f32 %v438, %v598
    %600 = vmatprep.mubr.bf16.mxu0 0
    %601 = vmatmul.mubr.bf16.gmra.mxu0 %v525
    %v602 = vpop.f32.mrf.mxu0
    %v603 = vadd.f32 %v443, %v602
    %v604 = vpop.f32.mrf.mxu0
    %v605 = vadd.f32 %v443, %v604
    %v606 = vpop.f32.mrf.mxu0
    %v607 = vadd.f32 %v448, %v606
    %v608 = vpop.f32.mrf.mxu0
    %v609 = vadd.f32 %v448, %v608
    %610 = vmatprep.mubr.bf16.mxu0 0
    %611 = vmatmul.mubr.bf16.gmra.mxu0 %v526
    %v612 = vpop.f32.mrf.mxu0
    %v613 = vadd.f32 %v453, %v612
    %v614 = vpop.f32.mrf.mxu0
    %v615 = vadd.f32 %v453, %v614
    %v616 = vpop.f32.mrf.mxu0
    %v617 = vadd.f32 %v458, %v616
    %v618 = vpop.f32.mrf.mxu0
    %v619 = vadd.f32 %v458, %v618
    %620 = vmatprep.mubr.bf16.mxu0 0
    %621 = vmatmul.mubr.bf16.gmra.mxu0 %v527
    %v622 = vpop.f32.mrf.mxu0
    %v623 = vadd.f32 %v463, %v622
    %v624 = vpop.f32.mrf.mxu0
    %v625 = vadd.f32 %v463, %v624
    %v626 = vpop.f32.mrf.mxu0
    %v627 = vadd.f32 %v468, %v626
    %v628 = vpop.f32.mrf.mxu0
    %v629 = vadd.f32 %v468, %v628
    %630 = vmatprep.mubr.bf16.mxu0 0
    %631 = vmatmul.mubr.bf16.gmra.mxu0 %v528
    %v632 = vpop.f32.mrf.mxu0
    %v633 = vadd.f32 %v473, %v632
    %v634 = vpop.f32.mrf.mxu0
    %v635 = vadd.f32 %v473, %v634
    %v636 = vpop.f32.mrf.mxu0
    %v637 = vadd.f32 %v478, %v636
    %v638 = vpop.f32.mrf.mxu0
    %v639 = vadd.f32 %v478, %v638
    %640 = vmatprep.mubr.bf16.mxu0 0
    %641 = vmatmul.mubr.bf16.gmra.mxu0 %v529
    %v642 = vpop.f32.mrf.mxu0
    %v643 = vadd.f32 %v483, %v642
    %v644 = vpop.f32.mrf.mxu0
    %v645 = vadd.f32 %v483, %v644
    %v646 = vpop.f32.mrf.mxu0
    %v647 = vadd.f32 %v488, %v646
    %v648 = vpop.f32.mrf.mxu0
    %v649 = vadd.f32 %v488, %v648
    %650 = vdwg.mxu0
    %v651 = vmax.f32 %v573, 0.0
    %v652 = vmax.f32 %v575, 0.0
    %v653 = vmax.f32 %v577, 0.0
    %v654 = vmax.f32 %v579, 0.0
    %v655 = vmax.f32 %v583, 0.0
    %v656 = vmax.f32 %v585, 0.0
    %v657 = vmax.f32 %v587, 0.0
    %v658 = vmax.f32 %v589, 0.0
    %v659 = vmax.f32 %v593, 0.0
    %v660 = vmax.f32 %v595, 0.0
    %v661 = vmax.f32 %v597, 0.0
    %v662 = vmax.f32 %v599, 0.0
    %v663 = vmax.f32 %v603, 0.0
    %v664 = vmax.f32 %v605, 0.0
    %v665 = vmax.f32 %v607, 0.0
    %v666 = vmax.f32 %v609, 0.0
    %v667 = vmax.f32 %v613, 0.0
    %v668 = vmax.f32 %v615, 0.0
    %v669 = vmax.f32 %v617, 0.0
    %v670 = vmax.f32 %v619, 0.0
    %v671 = vmax.f32 %v623, 0.0
    %v672 = vmax.f32 %v625, 0.0
    %v673 = vmax.f32 %v627, 0.0
    %v674 = vmax.f32 %v629, 0.0
    %v675 = vmax.f32 %v633, 0.0
    %v676 = vmax.f32 %v635, 0.0
    %v677 = vmax.f32 %v637, 0.0
    %v678 = vmax.f32 %v639, 0.0
    %v679 = vmax.f32 %v643, 0.0
    %v680 = vmax.f32 %v645, 0.0
    %v681 = vmax.f32 %v647, 0.0
    %v682 = vmax.f32 %v649, 0.0
    %v683 = vld [vmem:[%s5] sm:$0xff]
    %v684 = vld [vmem:[%s5 + $0x8] sm:$0xff]
    %v685 = vld [vmem:[%s5 + $0x10] sm:$0xff]
    %v686 = vld [vmem:[%s5 + $0x18] sm:$0xff]
    %v687 = vld [vmem:[%s5 + $0x20] sm:$0xff]
    %v688 = vld [vmem:[%s5 + $0x28] sm:$0xff]
    %v689 = vld [vmem:[%s5 + $0x30] sm:$0xff]
    %v690 = vld [vmem:[%s5 + $0x38] sm:$0xff]
    %v691 = vld [vmem:[%s5 + $0x40] sm:$0xff]
    %v692 = vld [vmem:[%s5 + $0x48] sm:$0xff]
    %v693 = vld [vmem:[%s5 + $0x50] sm:$0xff]
    %v694 = vld [vmem:[%s5 + $0x58] sm:$0xff]
    %v695 = vld [vmem:[%s5 + $0x60] sm:$0xff]
    %v696 = vld [vmem:[%s5 + $0x68] sm:$0xff]
    %v697 = vld [vmem:[%s5 + $0x70] sm:$0xff]
    %v698 = vld [vmem:[%s5 + $0x78] sm:$0xff]
    %700 = vset.pattern.permute.xlu0 0
    %701 = vperm.xlu0 %700, %v683
    %v702 = vpop.permute.xlu0 %701
    %705 = vset.pattern.permute.xlu0 0
    %706 = vperm.xlu0 %705, %v684
    %v707 = vpop.permute.xlu0 %706
    %710 = vset.pattern.permute.xlu0 0
    %711 = vperm.xlu0 %710, %v685
    %v712 = vpop.permute.xlu0 %711
    %715 = vset.pattern.permute.xlu0 0
    %716 = vperm.xlu0 %715, %v686
    %v717 = vpop.permute.xlu0 %716
    %720 = vset.pattern.permute.xlu0 0
    %721 = vperm.xlu0 %720, %v687
    %v722 = vpop.permute.xlu0 %721
    %725 = vset.pattern.permute.xlu0 0
    %726 = vperm.xlu0 %725, %v688
    %v727 = vpop.permute.xlu0 %726
    %730 = vset.pattern.permute.xlu0 0
    %731 = vperm.xlu0 %730, %v689
    %v732 = vpop.permute.xlu0 %731
    %735 = vset.pattern.permute.xlu0 0
    %736 = vperm.xlu0 %735, %v690
    %v737 = vpop.permute.xlu0 %736
    %740 = vset.pattern.permute.xlu0 0
    %741 = vperm.xlu0 %740, %v691
    %v742 = vpop.permute.xlu0 %741
    %745 = vset.pattern.permute.xlu0 0
    %746 = vperm.xlu0 %745, %v692
    %v747 = vpop.permute.xlu0 %746
    %750 = vset.pattern.permute.xlu0 0
    %751 = vperm.xlu0 %750, %v693
    %v752 = vpop.permute.xlu0 %751
    %755 = vset.pattern.permute.xlu0 0
    %756 = vperm.xlu0 %755, %v694
    %v757 = vpop.permute.xlu0 %756
    %760 = vset.pattern.permute.xlu0 0
    %761 = vperm.xlu0 %760, %v695
    %v762 = vpop.permute.xlu0 %761
    %765 = vset.pattern.permute.xlu0 0
    %766 = vperm.xlu0 %765, %v696
    %v767 = vpop.permute.xlu0 %766
    %770 = vset.pattern.permute.xlu0 0
    %771 = vperm.xlu0 %770, %v697
    %v772 = vpop.permute.xlu0 %771
    %775 = vset.pattern.permute.xlu0 0
    %776 = vperm.xlu0 %775, %v698
    %v777 = vpop.permute.xlu0 %776
    %v779 = vmul.f32 %v651, %v702
    %v780 = vmul.f32 %v652, %v702
    %v781 = vmul.f32 %v653, %v707
    %v782 = vmul.f32 %v654, %v707
    %v783 = vmul.f32 %v655, %v712
    %v784 = vmul.f32 %v656, %v712
    %v785 = vmul.f32 %v657, %v717
    %v786 = vmul.f32 %v658, %v717
    %v787 = vmul.f32 %v659, %v722
    %v788 = vmul.f32 %v660, %v722
    %v789 = vmul.f32 %v661, %v727
    %v790 = vmul.f32 %v662, %v727
    %v791 = vmul.f32 %v663, %v732
    %v792 = vmul.f32 %v664, %v732
    %v793 = vmul.f32 %v665, %v737
    %v794 = vmul.f32 %v666, %v737
    %v795 = vmul.f32 %v667, %v742
    %v796 = vmul.f32 %v668, %v742
    %v797 = vmul.f32 %v669, %v747
    %v798 = vmul.f32 %v670, %v747
    %v799 = vmul.f32 %v671, %v752
    %v800 = vmul.f32 %v672, %v752
    %v801 = vmul.f32 %v673, %v757
    %v802 = vmul.f32 %v674, %v757
    %v803 = vmul.f32 %v675, %v762
    %v804 = vmul.f32 %v676, %v762
    %v805 = vmul.f32 %v677, %v767
    %v806 = vmul.f32 %v678, %v767
    %v807 = vmul.f32 %v679, %v772
    %v808 = vmul.f32 %v680, %v772
    %v809 = vmul.f32 %v681, %v777
    %v810 = vmul.f32 %v682, %v777
    %v811 = vadd.f32 %v779, %v781
    %v812 = vadd.f32 %v811, %v783
    %v813 = vadd.f32 %v812, %v785
    %v814 = vadd.f32 %v813, %v787
    %v815 = vadd.f32 %v814, %v789
    %v816 = vadd.f32 %v815, %v791
    %v817 = vadd.f32 %v816, %v793
    %v818 = vadd.f32 %v817, %v795
    %v819 = vadd.f32 %v818, %v797
    %v820 = vadd.f32 %v819, %v799
    %v821 = vadd.f32 %v820, %v801
    %v822 = vadd.f32 %v821, %v803
    %v823 = vadd.f32 %v822, %v805
    %v824 = vadd.f32 %v823, %v807
    %v825 = vadd.f32 %v824, %v809
    %v826 = vrot.slane %v825, 4
    %v827 = vadd.f32 %v825, %v826
    %v828 = vrot.slane %v827, 2
    %v829 = vadd.f32 %v827, %v828
    %v830 = vrot.slane %v829, 1
    %v831 = vadd.f32 %v829, %v830
    %v832 = vadd.f32 %v780, %v782
    %v833 = vadd.f32 %v832, %v784
    %v834 = vadd.f32 %v833, %v786
    %v835 = vadd.f32 %v834, %v788
    %v836 = vadd.f32 %v835, %v790
    %v837 = vadd.f32 %v836, %v792
    %v838 = vadd.f32 %v837, %v794
    %v839 = vadd.f32 %v838, %v796
    %v840 = vadd.f32 %v839, %v798
    %v841 = vadd.f32 %v840, %v800
    %v842 = vadd.f32 %v841, %v802
    %v843 = vadd.f32 %v842, %v804
    %v844 = vadd.f32 %v843, %v806
    %v845 = vadd.f32 %v844, %v808
    %v846 = vadd.f32 %v845, %v810
    %v847 = vrot.slane %v846, 4
    %v848 = vadd.f32 %v846, %v847
    %v849 = vrot.slane %v848, 2
    %v850 = vadd.f32 %v848, %v849
    %v851 = vrot.slane %v850, 1
    %v852 = vadd.f32 %v850, %v851
    %s853 = sld [smem:[#allocation2]]
    %v854 = vstv %s853
    %v855 = vadd.f32 %v831, %v854
    %v856 = vadd.f32 %v852, %v854
    %v859 = vcombine.low %v855, %v856
    %v861 = vunpack.c.l.s4 1966171168
    %v862 = vunpack.c.0.s8 %v861
    %v863 = vlaneseq
    %v864 = vshrl.u32 %v863, 7
    %v865 = vsub.s32 %v862, %v864
    %v866 = vrot.slane %v859, %v865
    %v868 = vunpack.c.l.s4 1966171168
    %v869 = vunpack.c.0.s8 %v868
    %v870 = vlaneseq
    %v871 = vshrl.u32 %v870, 7
    %v872 = vsub.s32 %v869, %v871
    %v873 = vrot.slane %v866, %v872
    %v875 = vlaneseq
    %vm876 = vcmp.ge.s32.totalorder %v875, 0
    %vm877 = vcmp.lt.s32.totalorder %v875, 256
    %vm878 = vmand %vm876, %vm877
    %879 = vst.msk [vmem:[#allocation3] sm:$0x3] %vm878, %v873
    // Predicated region
    $region30: #{tpu_custom_call.1} parent=1 // pred_check
      _
    $region31: #{tpu_custom_call.1} parent=1 // pred_check_branch
      %881 = sbr.rel (0) target = $region33
    $region32: #{tpu_custom_call.1} parent=1 // pred_region
      %s883 = ssub.s32 32, 32
      %884 = vsyncadd [#allocation4], %s883
      %s886 = sshll.u32 [#allocation3], 4
      %s887 = int_to_ptr.vmem [resolvable:$true] %s886
      %889 = dma.vmem_to_hbm [thread:$0]  %s887, 32, %s7, [#allocation4]
    $region33: #{tpu_custom_call.1} parent=1 // pred_fallthru
      _
    // Predicated region
    $region34: #{tpu_custom_call.1} parent=1 // pred_check
      _
    $region35: #{tpu_custom_call.1} parent=1 // pred_check_branch
      %891 = sbr.rel (0) target = $region37
    $region36: #{tpu_custom_call.1} parent=1 // pred_region
      %892 = dma.done [#allocation4], 32
    $region37: #{tpu_custom_call.1} parent=1 // pred_fallthru
      _
    %893 = vsyncpa [#allocation4], 1

</llo_original>
